<compile_context>
chip_gen: v6e
topology: v6e:2x2x1
jax: 0.10.0
libtpu: 0.0.40
codegen_flags: <defaults>
</compile_context>

<pallas_src>
import functools

import jax
import jax.numpy as jnp
from jax import lax
from jax.experimental import pallas as pl
from jax.experimental.pallas import tpu as pltpu


# ---------------------------------------------------------------------------
# Kernel
# ---------------------------------------------------------------------------
def _make_att_kernel(scale, tk, n_valid, compute_dtype):
    """Build the flash-attention body.

    scale:         1/sqrt(d), folded into q once per query tile.
    tk:            static KV tile size (for edge masking).
    n_valid:       true KV length, or None when no padding was added (mask elided).
    compute_dtype: dtype fed to the MXU (q/k/p/v casts); accumulation is fp32.
    """
    needs_mask = n_valid is not None

    def kernel(q_ref, k_ref, v_ref, o_ref, qs_sc, m_sc, l_sc, acc_sc):
        kv = pl.program_id(1)

        @pl.when(kv == 0)
        def _():
            m_sc[...] = jnp.full_like(m_sc, -jnp.inf)
            l_sc[...] = jnp.zeros_like(l_sc)
            acc_sc[...] = jnp.zeros_like(acc_sc)
            # Hoisted: scale q ONCE per query tile (q stays VMEM-resident across kv steps).
            qs_sc[...] = (q_ref[...].astype(jnp.float32) * scale).astype(qs_sc.dtype)

        # QK^T on the MXU without an explicit transpose: contract the D axes directly.
        s = lax.dot_general(
            qs_sc[...],
            k_ref[...].astype(compute_dtype),
            (((1,), (1,)), ((), ())),
            preferred_element_type=jnp.float32,
        )

        if needs_mask:
            # Only emitted when N was padded: mask padded key columns to -inf.
            col = kv * tk + lax.broadcasted_iota(jnp.int32, s.shape, 1)
            s = jnp.where(col < n_valid, s, -jnp.inf)

        # Online (streaming) softmax, fp32 math.
        m_prev = m_sc[...]
        m_new = jnp.maximum(m_prev, jnp.max(s, axis=-1, keepdims=True))
        alpha = jnp.exp(m_prev - m_new)
        p = jnp.exp(s - m_new)

        l_sc[...] = alpha * l_sc[...] + jnp.sum(p, axis=-1, keepdims=True)
        # Native-dtype MXU feed for the PV matmul; fp32 accumulate.
        acc_sc[...] = alpha * acc_sc[...] + jnp.dot(
            p.astype(compute_dtype),
            v_ref[...].astype(compute_dtype),
            preferred_element_type=jnp.float32,
        )
        m_sc[...] = m_new

        @pl.when(kv == pl.num_programs(1) - 1)
        def _():
            # Runs once per query tile on a (tm, 1) vector -> exact reciprocal is ~free.
            inv = pl.reciprocal(l_sc[...], approx=False)
            o_ref[...] = (acc_sc[...] * inv).astype(o_ref.dtype)

    return kernel


# ---------------------------------------------------------------------------
# Tiling helpers
# ---------------------------------------------------------------------------
def _round_up(x, m):
    return ((x + m - 1) // m) * m


def _row_align(dtype):
    # Sub-32-bit dtypes pack rows along sublanes: f32 -> 8, bf16 -> 16, int8/fp8 -> 32.
    return max(8, 32 // jnp.dtype(dtype).itemsize)


def _pick_tile(total, target, align):
    """Pick a tile size: multiple of `align`, <= target, minimizing padded extent
    cdiv(total, tile) * tile (ties broken toward the larger tile)."""
    target = max(align, (target // align) * align)
    cap = min(target, _round_up(total, align))
    best_tile, best_pad = align, None
    t = cap
    while t >= align:
        padded = -(-total // t) * t
        if best_pad is None or padded < best_pad:
            best_pad, best_tile = padded, t
        t -= align
    return best_tile


def _vmem_limit_bytes(tm, tk, D, Dv, in_itemsize, out_itemsize, comp_itemsize):
    # Double-buffered in/out tiles + persistent scratch, with headroom.
    dbuf = 2 * ((tm * D + tk * D + tk * Dv) * in_itemsize + tm * Dv * out_itemsize)
    scratch = tm * D * comp_itemsize + (tm * Dv + 2 * tm) * 4
    est = dbuf + scratch
    return int(min(64 * 1024 * 1024, max(32 * 1024 * 1024, 3 * est)))


# ---------------------------------------------------------------------------
# Wrapper
# ---------------------------------------------------------------------------
def att(q, k, v, *, tm=None, tk=None, mxu_dtype=None):
    """softmax(q @ k.T / sqrt(d), -1) @ v as a flash-style Pallas TPU kernel.

    q: (M, D), k: (N, D), v: (N, Dv).
    Grid = (query tiles ["parallel"], kv tiles ["arbitrary" reduction]).
    Non-divisible M/N are padded; padded KV columns are masked in-kernel.
    mxu_dtype: optionally cast MXU operands (e.g. jnp.bfloat16 for fp32 callers);
               accumulation stays fp32.
    """
    M, D = q.shape
    N, Dk = k.shape
    assert Dk == D, "k feature dim must match q"
    Nv, Dv = v.shape
    assert Nv == N, "v rows must match k rows"

    compute_dtype = jnp.dtype(mxu_dtype) if mxu_dtype is not None else jnp.dtype(q.dtype)
    align_q = _row_align(q.dtype)
    align_k = _row_align(k.dtype)

    if tm is None:
        tm = _pick_tile(M, 512, align_q)           # bigger q tile -> fewer K/V HBM re-reads
        # v7x has 2 TensorCores: make sure the "parallel" query axis has >=2 tiles when possible.
        if -(-M // tm) < 2 and M > align_q:
            tm = max(align_q, _round_up(-(-M // 2), align_q))
    else:
        tm = max(align_q, _round_up(int(tm), align_q))

    if tk is None:
        tk = _pick_tile(N, 1024, align_k)          # fewer reduction steps / rescales
    else:
        tk = max(align_k, _round_up(int(tk), align_k))

    M_pad = -(-M // tm) * tm
    N_pad = -(-N // tk) * tk

    qp = jnp.pad(q, ((0, M_pad - M), (0, 0))) if M_pad != M else q
    kp = jnp.pad(k, ((0, N_pad - N), (0, 0))) if N_pad != N else k
    vp = jnp.pad(v, ((0, N_pad - N), (0, 0))) if N_pad != N else v

    grid = (M_pad // tm, N_pad // tk)
    scale = 1.0 / (D ** 0.5)
    n_valid = N if N_pad != N else None

    kernel = _make_att_kernel(scale, tk, n_valid, compute_dtype)

    # TODO(synk): for multi-head / batched callers, fuse heads so the lane (last) dim of
    # Q/K/V/O is >=128 (lane-dense vst stores, full-width MXU contraction); a single-head
    # 2-D (M, D) module with D=32 cannot express that without changing its semantics.
    # TODO(synk): on v7x, sweep pipeline_mode=pl.Buffered(3) on the K/V BlockSpecs.
    out = pl.pallas_call(
        kernel,
        out_shape=jax.ShapeDtypeStruct((M_pad, Dv), q.dtype),
        grid_spec=pltpu.PrefetchScalarGridSpec(
            num_scalar_prefetch=0,
            grid=grid,
            in_specs=[
                pl.BlockSpec((tm, D), lambda i, j: (i, 0)),    # q tile (resident across kv)
                pl.BlockSpec((tk, D), lambda i, j: (j, 0)),    # k tile (streamed)
                pl.BlockSpec((tk, Dv), lambda i, j: (j, 0)),   # v tile (streamed)
            ],
            out_specs=pl.BlockSpec((tm, Dv), lambda i, j: (i, 0)),
            scratch_shapes=[
                pltpu.VMEM((tm, D), compute_dtype),   # pre-scaled q (hoisted out of kv loop)
                pltpu.VMEM((tm, 1), jnp.float32),     # running max m
                pltpu.VMEM((tm, 1), jnp.float32),     # running denom l
                pltpu.VMEM((tm, Dv), jnp.float32),    # fp32 output accumulator
            ],
        ),
        compiler_params=pltpu.CompilerParams(
            dimension_semantics=("parallel", "arbitrary"),
            vmem_limit_bytes=_vmem_limit_bytes(
                tm, tk, D, Dv,
                jnp.dtype(q.dtype).itemsize,
                jnp.dtype(q.dtype).itemsize,
                compute_dtype.itemsize,
            ),
        ),
    )(qp, kp, vp)

    return out[:M] if M_pad != M else out


def att_ref(q, k, v):
    d = q.shape[-1]
    s = (q.astype(jnp.float32) @ k.astype(jnp.float32).T) / (d ** 0.5)
    p = jax.nn.softmax(s, axis=-1)
    return (p @ v.astype(jnp.float32)).astype(q.dtype)


# ---------------------------------------------------------------------------
# Test
# ---------------------------------------------------------------------------
if __name__ == "__main__":
    key = jax.random.PRNGKey(0)
    kq, kk, kv_ = jax.random.split(key, 3)

    D, Dv = 32, 32

    # Case 1: aligned shapes; small forced tiles exercise the streamed online softmax
    # (2 query tiles x 2 kv tiles).
    M, N = 16, 16
    q = jax.random.normal(kq, (M, D), dtype=jnp.float32)
    k = jax.random.normal(kk, (N, D), dtype=jnp.float32)
    v = jax.random.normal(kv_, (N, Dv), dtype=jnp.float32)
    out = att(q, k, v, tm=8, tk=8)
    jax.block_until_ready(out)
    ref = att_ref(q, k, v)
    assert out.shape == (M, Dv)
    assert jnp.allclose(out, ref, atol=1e-4, rtol=1e-4), "case 1 mismatch vs reference"

    # Case 2: non-divisible shapes -> padded inputs + masked edge KV tile + default tm.
    M2, N2 = 20, 25
    q2 = jax.random.normal(kq, (M2, D), dtype=jnp.float32)
    k2 = jax.random.normal(kk, (N2, D), dtype=jnp.float32)
    v2 = jax.random.normal(kv_, (N2, Dv), dtype=jnp.float32)
    out2 = att(q2, k2, v2, tk=8)
    jax.block_until_ready(out2)
    ref2 = att_ref(q2, k2, v2)
    assert out2.shape == (M2, Dv)
    assert jnp.allclose(out2, ref2, atol=1e-4, rtol=1e-4), "case 2 mismatch vs reference"

    print("KERNEL_OK")
</pallas_src>

<mosaic_0001>
module attributes {stable_mosaic.version = 11 : i64} {
  func.func @kernel(%arg0: i32, %arg1: i32, %arg2: memref<8x32xf32, #tpu.memory_space<vmem>>, %arg3: memref<8x32xf32, #tpu.memory_space<vmem>>, %arg4: memref<8x32xf32, #tpu.memory_space<vmem>>, %arg5: memref<8x32xf32, #tpu.memory_space<vmem>>, %arg6: memref<8x32xf32, #tpu.memory_space<vmem>>, %arg7: memref<8x1xf32, #tpu.memory_space<vmem>>, %arg8: memref<8x1xf32, #tpu.memory_space<vmem>>, %arg9: memref<8x32xf32, #tpu.memory_space<vmem>>) attributes {dimension_semantics = [#tpu.dimension_semantics<parallel>, #tpu.dimension_semantics<arbitrary>], iteration_bounds = array<i64: 2, 2>, scalar_prefetch = 0 : i64, scratch_operands = 4 : i64, tpu.core_type = #tpu.core_type<tc>, window_params = [{transform_indices = @transform_0, window_bounds = array<i64: 8, 32>}, {transform_indices = @transform_1, window_bounds = array<i64: 8, 32>}, {transform_indices = @transform_2, window_bounds = array<i64: 8, 32>}, {transform_indices = @transform_3, window_bounds = array<i64: 8, 32>}]} {
    %c0_i32 = arith.constant 0 : i32
    %0 = arith.cmpi eq, %arg1, %c0_i32 : i32
    %1 = arith.extui %0 : i1 to i32
    %c0_i32_0 = arith.constant 0 : i32
    %2 = arith.cmpi ne, %1, %c0_i32_0 : i32
    scf.if %2 {
      %cst_22 = arith.constant 0xFF800000 : f32
      %32 = vector.broadcast %cst_22 : f32 to vector<8x1xf32>
      %c0_23 = arith.constant 0 : index
      %c0_24 = arith.constant 0 : index
      %33 = vector.load %arg7[%c0_23, %c0_24] : memref<8x1xf32, #tpu.memory_space<vmem>>, vector<8x1xf32>
      tpu.vector_store %arg7[%c0_23, %c0_24], %32 {strides = array<i32>} : memref<8x1xf32, #tpu.memory_space<vmem>>, vector<8x1xf32>,
      %cst_25 = arith.constant 0.000000e+00 : f32
      %34 = vector.broadcast %cst_25 : f32 to vector<8x1xf32>
      %c0_26 = arith.constant 0 : index
      %c0_27 = arith.constant 0 : index
      %35 = vector.load %arg8[%c0_26, %c0_27] : memref<8x1xf32, #tpu.memory_space<vmem>>, vector<8x1xf32>
      tpu.vector_store %arg8[%c0_26, %c0_27], %34 {strides = array<i32>} : memref<8x1xf32, #tpu.memory_space<vmem>>, vector<8x1xf32>,
      %cst_28 = arith.constant 0.000000e+00 : f32
      %36 = vector.broadcast %cst_28 : f32 to vector<8x32xf32>
      %c0_29 = arith.constant 0 : index
      %c0_30 = arith.constant 0 : index
      %37 = vector.load %arg9[%c0_29, %c0_30] : memref<8x32xf32, #tpu.memory_space<vmem>>, vector<8x32xf32>
      tpu.vector_store %arg9[%c0_29, %c0_30], %36 {strides = array<i32>} : memref<8x32xf32, #tpu.memory_space<vmem>>, vector<8x32xf32>,
      %c0_31 = arith.constant 0 : index
      %c0_32 = arith.constant 0 : index
      %38 = vector.load %arg2[%c0_31, %c0_32] : memref<8x32xf32, #tpu.memory_space<vmem>>, vector<8x32xf32>
      %cst_33 = arith.constant 0.176776692 : f32
      %39 = vector.broadcast %cst_33 : f32 to vector<8x32xf32>
      %40 = arith.mulf %38, %39 : vector<8x32xf32>
      %c0_34 = arith.constant 0 : index
      %c0_35 = arith.constant 0 : index
      %41 = vector.load %arg6[%c0_34, %c0_35] : memref<8x32xf32, #tpu.memory_space<vmem>>, vector<8x32xf32>
      tpu.vector_store %arg6[%c0_34, %c0_35], %40 {strides = array<i32>} : memref<8x32xf32, #tpu.memory_space<vmem>>, vector<8x32xf32>,
    } else {
    }
    %c0 = arith.constant 0 : index
    %c0_1 = arith.constant 0 : index
    %3 = vector.load %arg6[%c0, %c0_1] : memref<8x32xf32, #tpu.memory_space<vmem>>, vector<8x32xf32>
    %c0_2 = arith.constant 0 : index
    %c0_3 = arith.constant 0 : index
    %4 = vector.load %arg3[%c0_2, %c0_3] : memref<8x32xf32, #tpu.memory_space<vmem>>, vector<8x32xf32>
    %cst = arith.constant dense<0.000000e+00> : vector<8x8xf32>
    %5 = tpu.matmul %3, %4, %cst {dimension_numbers = #tpu.dot_dimension_numbers<[1], [1], [0], [0], [0, 0, 1, 0], [], []>} : vector<8x32xf32>, vector<8x32xf32>, vector<8x8xf32> -> vector<8x8xf32>
    %c0_4 = arith.constant 0 : index
    %c0_5 = arith.constant 0 : index
    %6 = vector.load %arg7[%c0_4, %c0_5] : memref<8x1xf32, #tpu.memory_space<vmem>>, vector<8x1xf32>
    %cst_6 = arith.constant dense<0xFF800000> : vector<8xf32>
    %7 = vector.multi_reduction <maximumf>, %5, %cst_6 [1] : vector<8x8xf32> to vector<8xf32>
    %8 = vector.shape_cast %7 : vector<8xf32> to vector<8x1xf32>
    %9 = arith.maximumf %6, %8 : vector<8x1xf32>
    %10 = arith.subf %6, %9 : vector<8x1xf32>
    %11 = math.exp %10 : vector<8x1xf32>
    %12 = vector.broadcast %9 : vector<8x1xf32> to vector<8x8xf32>
    %13 = arith.subf %5, %12 : vector<8x8xf32>
    %14 = math.exp %13 : vector<8x8xf32>
    %c0_7 = arith.constant 0 : index
    %c0_8 = arith.constant 0 : index
    %15 = vector.load %arg8[%c0_7, %c0_8] : memref<8x1xf32, #tpu.memory_space<vmem>>, vector<8x1xf32>
    %16 = arith.mulf %11, %15 : vector<8x1xf32>
    %cst_9 = arith.constant dense<0.000000e+00> : vector<8xf32>
    %17 = vector.multi_reduction <add>, %14, %cst_9 [1] : vector<8x8xf32> to vector<8xf32>
    %18 = vector.shape_cast %17 : vector<8xf32> to vector<8x1xf32>
    %19 = arith.addf %16, %18 : vector<8x1xf32>
    %c0_10 = arith.constant 0 : index
    %c0_11 = arith.constant 0 : index
    %20 = vector.load %arg8[%c0_10, %c0_11] : memref<8x1xf32, #tpu.memory_space<vmem>>, vector<8x1xf32>
    tpu.vector_store %arg8[%c0_10, %c0_11], %19 {strides = array<i32>} : memref<8x1xf32, #tpu.memory_space<vmem>>, vector<8x1xf32>,
    %c0_12 = arith.constant 0 : index
    %c0_13 = arith.constant 0 : index
    %21 = vector.load %arg9[%c0_12, %c0_13] : memref<8x32xf32, #tpu.memory_space<vmem>>, vector<8x32xf32>
    %22 = vector.broadcast %11 : vector<8x1xf32> to vector<8x32xf32>
    %23 = arith.mulf %22, %21 : vector<8x32xf32>
    %c0_14 = arith.constant 0 : index
    %c0_15 = arith.constant 0 : index
    %24 = vector.load %arg4[%c0_14, %c0_15] : memref<8x32xf32, #tpu.memory_space<vmem>>, vector<8x32xf32>
    %cst_16 = arith.constant dense<0.000000e+00> : vector<8x32xf32>
    %25 = tpu.matmul %14, %24, %cst_16 {dimension_numbers = #tpu.dot_dimension_numbers<[1], [0], [0], [1], [0, 0, 1, 1], [], []>} : vector<8x8xf32>, vector<8x32xf32>, vector<8x32xf32> -> vector<8x32xf32>
    %26 = arith.addf %23, %25 : vector<8x32xf32>
    %c0_17 = arith.constant 0 : index
    %c0_18 = arith.constant 0 : index
    %27 = vector.load %arg9[%c0_17, %c0_18] : memref<8x32xf32, #tpu.memory_space<vmem>>, vector<8x32xf32>
    tpu.vector_store %arg9[%c0_17, %c0_18], %26 {strides = array<i32>} : memref<8x32xf32, #tpu.memory_space<vmem>>, vector<8x32xf32>,
    %c0_19 = arith.constant 0 : index
    %c0_20 = arith.constant 0 : index
    %28 = vector.load %arg7[%c0_19, %c0_20] : memref<8x1xf32, #tpu.memory_space<vmem>>, vector<8x1xf32>
    tpu.vector_store %arg7[%c0_19, %c0_20], %9 {strides = array<i32>} : memref<8x1xf32, #tpu.memory_space<vmem>>, vector<8x1xf32>,
    %c1_i32 = arith.constant 1 : i32
    %29 = arith.cmpi eq, %arg1, %c1_i32 : i32
    %30 = arith.extui %29 : i1 to i32
    %c0_i32_21 = arith.constant 0 : i32
    %31 = arith.cmpi ne, %30, %c0_i32_21 : i32
    scf.if %31 {
      %c0_22 = arith.constant 0 : index
      %c0_23 = arith.constant 0 : index
      %32 = vector.load %arg8[%c0_22, %c0_23] : memref<8x1xf32, #tpu.memory_space<vmem>>, vector<8x1xf32>
      %33 = tpu.reciprocal %32 : vector<8x1xf32> -> vector<8x1xf32>
      %c0_24 = arith.constant 0 : index
      %c0_25 = arith.constant 0 : index
      %34 = vector.load %arg9[%c0_24, %c0_25] : memref<8x32xf32, #tpu.memory_space<vmem>>, vector<8x32xf32>
      %35 = vector.broadcast %33 : vector<8x1xf32> to vector<8x32xf32>
      %36 = arith.mulf %34, %35 : vector<8x32xf32>
      %c0_26 = arith.constant 0 : index
      %c0_27 = arith.constant 0 : index
      %37 = vector.load %arg5[%c0_26, %c0_27] : memref<8x32xf32, #tpu.memory_space<vmem>>, vector<8x32xf32>
      tpu.vector_store %arg5[%c0_26, %c0_27], %36 {strides = array<i32>} : memref<8x32xf32, #tpu.memory_space<vmem>>, vector<8x32xf32>,
    } else {
    }
    return
  }
  func.func @transform_0(%arg0: i32, %arg1: i32) -> (i32, i32) {
    %c0_i32 = arith.constant 0 : i32
    %c0_i32_0 = arith.constant 0 : i32
    return %arg0, %c0_i32 : i32, i32
  }
  func.func @transform_1(%arg0: i32, %arg1: i32) -> (i32, i32) {
    %c0_i32 = arith.constant 0 : i32
    %c0_i32_0 = arith.constant 0 : i32
    return %arg1, %c0_i32 : i32, i32
  }
  func.func @transform_2(%arg0: i32, %arg1: i32) -> (i32, i32) {
    %c0_i32 = arith.constant 0 : i32
    %c0_i32_0 = arith.constant 0 : i32
    return %arg1, %c0_i32 : i32, i32
  }
  func.func @transform_3(%arg0: i32, %arg1: i32) -> (i32, i32) {
    %c0_i32 = arith.constant 0 : i32
    %c0_i32_0 = arith.constant 0 : i32
    return %arg0, %c0_i32 : i32, i32
  }
}

</mosaic_0001>

<llo_original>
// kernel: tpu_custom_call.1
$region0: #{tpu_custom_call.1}
  #allocation0 [shape = 'u32[]', space=smem, size = 0x4, offset = 0x4, fixed_abs, tag = 'smem constant byte address 0x4 - core index']
  #allocation1 [shape = 'u32[144,128]{1,0:T(1,128)}', space=vmem, size = 0x12000, scoped, tag = 'internal scratch']
  #allocation2 [shape = 'f32[8,32]{1,0:T(8,128)}', space=vmem, size = 0x1000, scoped, tag = 'scratch operand']
  #allocation3 [shape = 'f32[8,1]{1,0:T(8,128)}', space=vmem, size = 0x1000, scoped, tag = 'scratch operand']
  #allocation4 [shape = 'f32[8,1]{1,0:T(8,128)}', space=vmem, size = 0x1000, scoped, tag = 'scratch operand']
  #allocation5 [shape = 'f32[8,32]{1,0:T(8,128)}', space=vmem, size = 0x1000, scoped, tag = 'scratch operand']
  %s0 = inlined_call_operand.hbm [shape: f32[16,32], index: 0, kind: input, shape index: {}]
  %s1 = inlined_call_operand.hbm [shape: f32[16,32], index: 1, kind: input, shape index: {}]
  %s2 = inlined_call_operand.hbm [shape: f32[16,32], index: 2, kind: input, shape index: {}]
  %s3 = inlined_call_operand.hbm [shape: f32[16,32], index: 3, kind: output, shape index: {}]
  %s4 = sld [smem:[#allocation0]]
  $region65: #{tpu_custom_call.1} parent=0
    _
  %s6 = ssub.s32 1, %s4
  %s7 = scalar_select 0, %s6, %s4
  $region1: #{tpu_custom_call.1} parent=0
    #allocation6 [shape = 'u8[8192]{0}', space=vmem, size = 0x2000, scoped, tag = 'input window, operand 0']
    #allocation7 [shape = 's32[2]{0}', space=sflag, size = 0x8, scoped, tag = 'scoped memory for tpu_custom_call.1']
    #allocation8 [shape = 's32[2]{0}', space=sflag, size = 0x8, scoped, tag = 'scoped memory for tpu_custom_call.1']
    #allocation9 [shape = 'u8[8192]{0}', space=vmem, size = 0x2000, scoped, tag = 'input window, operand 1']
    #allocation10 [shape = 's32[2]{0}', space=sflag, size = 0x8, scoped, tag = 'scoped memory for tpu_custom_call.1']
    #allocation11 [shape = 'u8[8192]{0}', space=vmem, size = 0x2000, scoped, tag = 'input window, operand 2']
    #allocation12 [shape = 'u8[8192]{0}', space=vmem, size = 0x2000, scoped, tag = 'output window, operand 0']
    %8 = vsyncpa [#allocation7], 0
    %s9 = scalar_lea.sflag [#allocation7], 1
    %10 = vsyncpa %s9, 0
    %11 = vsyncpa [#allocation10], 0
    %s12 = scalar_lea.sflag [#allocation10], 1
    %13 = vsyncpa %s12, 0
    %14 = vsyncpa [#allocation8], 0
    %s15 = scalar_lea.sflag [#allocation8], 1
    %16 = vsyncpa %s15, 0
    loop: start=0, step=1, limit=6
    $region2: #{tpu_custom_call.1} parent=1 // loop_pre_header
      _
    $region3: #{tpu_custom_call.1} parent=1 // loop_header
      %s18 = sphi 0, %s22
      %p19 = scmp.ge.s32.totalorder %s18, 6
      %s25 = sphi 0, %s37
      %s26 = sphi 0, %s33
      %s27 = sphi 0, %s25
      %s28 = sphi 0, %s26
      %s29 = sphi 0, %s27
      %s30 = sphi 0, %s28
      %s40 = sphi 0, %s42
      %s43 = sphi 0, %s40
      %s44 = sphi 0, %s43
      %s60 = sphi 0, %s44
      %s66 = sphi 0, %s68
      %s69 = sphi 0, %s66
      %s70 = sphi 0, %s69
      %s86 = sphi 0, %s70
      %s92 = sphi 0, %s94
      %s95 = sphi 0, %s92
      %s96 = sphi 0, %s95
      %s112 = sphi 0, %s96
      %s118 = sphi 0, %s120
      %s121 = sphi 0, %s118
      %s122 = sphi 0, %s121
      %s138 = sphi 0, %s122
    $region4: #{tpu_custom_call.1} parent=1 // loop_header_branch
      %21 = sbr.rel (%p19) target = $region8
    $region5: #{tpu_custom_call.1} parent=1 // loop_body
      %s23 = ssub.s32 %s18, 1
      %s24 = ssub.s32 %s18, 2
      %s31 = sadd.s32 1, %s26
      %p32 = scmp.ge.s32.totalorder %s31, 2
      %s33 = scalar_select %p32, 0, %s31
      %s34 = sadd.s32 1, %s25
      %s35 = scalar_select %p32, %s34, %s25
      %p36 = scmp.ge.s32.totalorder %s35, 2
      %s37 = scalar_select %p36, 0, %s35
      %s38 = ssub.s32 %s25, %s37
      %p39 = scmp.eq.s32.totalorder %s38, 0
      %s41 = sadd.s32 %s40, 1
      %s42 = scalar_select %p39, %s40, %s41
      %p45 = pneg %p39
      %p46 = scmp.eq.s32.totalorder %s18, 3
      %p47 = por %p45, %p46
      %p48 = scmp.ne.s32.totalorder %s40, %s43
      %p49 = scmp.eq.s32.totalorder %s18, 0
      %p50 = por %p48, %p49
      %p51 = scmp.ne.s32.totalorder %s40, %s43
      %p52 = scmp.eq.s32.totalorder %s23, 3
      %p53 = por %p51, %p52
      %p54 = scmp.ne.s32.totalorder %s43, %s44
      %p55 = scmp.eq.s32.totalorder %s23, 0
      %p56 = por %p54, %p55
      %p57 = scmp.ne.s32.totalorder %s43, %s44
      %p58 = scmp.eq.s32.totalorder %s24, 3
      %p59 = por %p57, %p58
      %p61 = scmp.ne.s32.totalorder %s44, %s60
      %p62 = scmp.eq.s32.totalorder %s24, 0
      %p63 = por %p61, %p62
      %s64 = ssub.s32 %s26, %s33
      %p65 = scmp.eq.s32.totalorder %s64, 0
      %s67 = sadd.s32 %s66, 1
      %s68 = scalar_select %p65, %s66, %s67
      %p71 = pneg %p65
      %p72 = scmp.eq.s32.totalorder %s18, 3
      %p73 = por %p71, %p72
      %p74 = scmp.ne.s32.totalorder %s66, %s69
      %p75 = scmp.eq.s32.totalorder %s18, 0
      %p76 = por %p74, %p75
      %p77 = scmp.ne.s32.totalorder %s66, %s69
      %p78 = scmp.eq.s32.totalorder %s23, 3
      %p79 = por %p77, %p78
      %p80 = scmp.ne.s32.totalorder %s69, %s70
      %p81 = scmp.eq.s32.totalorder %s23, 0
      %p82 = por %p80, %p81
      %p83 = scmp.ne.s32.totalorder %s69, %s70
      %p84 = scmp.eq.s32.totalorder %s24, 3
      %p85 = por %p83, %p84
      %p87 = scmp.ne.s32.totalorder %s70, %s86
      %p88 = scmp.eq.s32.totalorder %s24, 0
      %p89 = por %p87, %p88
      %s90 = ssub.s32 %s26, %s33
      %p91 = scmp.eq.s32.totalorder %s90, 0
      %s93 = sadd.s32 %s92, 1
      %s94 = scalar_select %p91, %s92, %s93
      %p97 = pneg %p91
      %p98 = scmp.eq.s32.totalorder %s18, 3
      %p99 = por %p97, %p98
      %p100 = scmp.ne.s32.totalorder %s92, %s95
      %p101 = scmp.eq.s32.totalorder %s18, 0
      %p102 = por %p100, %p101
      %p103 = scmp.ne.s32.totalorder %s92, %s95
      %p104 = scmp.eq.s32.totalorder %s23, 3
      %p105 = por %p103, %p104
      %p106 = scmp.ne.s32.totalorder %s95, %s96
      %p107 = scmp.eq.s32.totalorder %s23, 0
      %p108 = por %p106, %p107
      %p109 = scmp.ne.s32.totalorder %s95, %s96
      %p110 = scmp.eq.s32.totalorder %s24, 3
      %p111 = por %p109, %p110
      %p113 = scmp.ne.s32.totalorder %s96, %s112
      %p114 = scmp.eq.s32.totalorder %s24, 0
      %p115 = por %p113, %p114
      %s116 = ssub.s32 %s25, %s37
      %p117 = scmp.eq.s32.totalorder %s116, 0
      %s119 = sadd.s32 %s118, 1
      %s120 = scalar_select %p117, %s118, %s119
      %p123 = pneg %p117
      %p124 = scmp.eq.s32.totalorder %s18, 3
      %p125 = por %p123, %p124
      %p126 = scmp.ne.s32.totalorder %s118, %s121
      %p127 = scmp.eq.s32.totalorder %s18, 0
      %p128 = por %p126, %p127
      %p129 = scmp.ne.s32.totalorder %s118, %s121
      %p130 = scmp.eq.s32.totalorder %s23, 3
      %p131 = por %p129, %p130
      %p132 = scmp.ne.s32.totalorder %s121, %s122
      %p133 = scmp.eq.s32.totalorder %s23, 0
      %p134 = por %p132, %p133
      %p135 = scmp.ne.s32.totalorder %s121, %s122
      %p136 = scmp.eq.s32.totalorder %s24, 3
      %p137 = por %p135, %p136
      %p139 = scmp.ne.s32.totalorder %s122, %s138
      %p140 = scmp.eq.s32.totalorder %s24, 0
      %p141 = por %p139, %p140
      %p142 = scmp.le.s32.totalorder 1, %s18
      %p143 = scmp.lt.s32.totalorder %s18, 5
      %p144 = pnand %p142, %p143
      %p145 = pneg %p144
      // Predicated region
      $region9: #{tpu_custom_call.1} parent=5 // pred_check
        _
      $region10: #{tpu_custom_call.1} parent=5 // pred_check_branch
        %147 = sbr.rel (%p144) target = $region12
      $region11: #{tpu_custom_call.1} parent=5 // pred_region
        %s148 = ssub.s32 %s18, 1
      $region12: #{tpu_custom_call.1} parent=5 // pred_fallthru
        _
      %p149 = scmp.lt.s32.totalorder %s18, 4
      // Predicated region
      $region13: #{tpu_custom_call.1} parent=5 // pred_check
        %p150 = pneg %p149
      $region14: #{tpu_custom_call.1} parent=5 // pred_check_branch
        %152 = sbr.rel (%p150) target = $region16
      $region15: #{tpu_custom_call.1} parent=5 // pred_region
        // Predicated region
        $region17: #{tpu_custom_call.1} parent=15 // pred_check
          %p153 = pneg %p50
        $region18: #{tpu_custom_call.1} parent=15 // pred_check_branch
          %155 = sbr.rel (%p153) target = $region20
        $region19: #{tpu_custom_call.1} parent=15 // pred_region
          %s156 = sand.u32 %s40, 1
          %s157 = scalar_lea.sflag [#allocation7], %s156
          %s158 = sand.u32 %s40, 1
          %s159 = smul.addr %s158, 8
          %s160 = scalar_lea.vmem [#allocation6], %s159
          %s162 = ssub.s32 128, 128
          %163 = vsyncadd %s157, %s162
          %s164 = smul.addr %s25, 128
          %s165 = scalar_lea.hbm %s0, %s164
          %s167 = sshll.u32 %s160, 4
          %s168 = int_to_ptr.vmem [resolvable:$true] %s167
          %170 = dma.hbm_to_vmem [thread:$0]  %s165, 128, %s168, %s157
        $region20: #{tpu_custom_call.1} parent=15 // pred_fallthru
          _
        // Predicated region
        $region21: #{tpu_custom_call.1} parent=15 // pred_check
          %p171 = pneg %p76
        $region22: #{tpu_custom_call.1} parent=15 // pred_check_branch
          %173 = sbr.rel (%p171) target = $region24
        $region23: #{tpu_custom_call.1} parent=15 // pred_region
          %s174 = sand.u32 %s18, 1
          %s175 = scalar_lea.sflag [#allocation10], %s174
          %s176 = sand.u32 %s66, 1
          %s177 = smul.addr %s176, 8
          %s178 = scalar_lea.vmem [#allocation9], %s177
          %s180 = ssub.s32 128, 128
          %181 = vsyncadd %s175, %s180
          %s182 = smul.addr %s26, 128
          %s183 = scalar_lea.hbm %s1, %s182
          %s185 = sshll.u32 %s178, 4
          %s186 = int_to_ptr.vmem [resolvable:$true] %s185
          %188 = dma.hbm_to_vmem [thread:$0]  %s183, 128, %s186, %s175
        $region24: #{tpu_custom_call.1} parent=15 // pred_fallthru
          _
        // Predicated region
        $region25: #{tpu_custom_call.1} parent=15 // pred_check
          %p189 = pneg %p102
        $region26: #{tpu_custom_call.1} parent=15 // pred_check_branch
          %191 = sbr.rel (%p189) target = $region28
        $region27: #{tpu_custom_call.1} parent=15 // pred_region
          %s192 = sand.u32 %s18, 1
          %s193 = scalar_lea.sflag [#allocation10], %s192
          %s194 = sand.u32 %s92, 1
          %s195 = smul.addr %s194, 8
          %s196 = scalar_lea.vmem [#allocation11], %s195
          %s198 = ssub.s32 128, 128
          %199 = vsyncadd %s193, %s198
          %s200 = smul.addr %s26, 128
          %s201 = scalar_lea.hbm %s2, %s200
          %s203 = sshll.u32 %s196, 4
          %s204 = int_to_ptr.vmem [resolvable:$true] %s203
          %206 = dma.hbm_to_vmem [thread:$0]  %s201, 128, %s204, %s193
        $region28: #{tpu_custom_call.1} parent=15 // pred_fallthru
          _
      $region16: #{tpu_custom_call.1} parent=5 // pred_fallthru
        _
      %p207 = scmp.le.s32.totalorder 1, %s18
      %p208 = scmp.lt.s32.totalorder %s18, 5
      %p209 = pnand %p207, %p208
      %p210 = pneg %p209
      // Predicated region
      $region29: #{tpu_custom_call.1} parent=5 // pred_check
        _
      $region30: #{tpu_custom_call.1} parent=5 // pred_check_branch
        %212 = sbr.rel (%p209) target = $region32
      $region31: #{tpu_custom_call.1} parent=5 // pred_region
        %s213 = ssub.s32 %s18, 1
        %s214 = sand.u32 %s43, 1
        %s215 = scalar_lea.sflag [#allocation7], %s214
        %s216 = sand.u32 %s43, 1
        %s217 = smul.addr %s216, 8
        %s218 = scalar_lea.vmem [#allocation6], %s217
        // Predicated region
        $region33: #{tpu_custom_call.1} parent=31 // pred_check
          %p219 = pneg %p56
        $region34: #{tpu_custom_call.1} parent=31 // pred_check_branch
          %221 = sbr.rel (%p219) target = $region36
        $region35: #{tpu_custom_call.1} parent=31 // pred_region
          %222 = dma.done %s215, 128
        $region36: #{tpu_custom_call.1} parent=31 // pred_fallthru
          _
        %s223 = sand.u32 %s23, 1
        %s224 = scalar_lea.sflag [#allocation10], %s223
        %s225 = sand.u32 %s69, 1
        %s226 = smul.addr %s225, 8
        %s227 = scalar_lea.vmem [#allocation9], %s226
        // Predicated region
        $region37: #{tpu_custom_call.1} parent=31 // pred_check
          %p228 = pneg %p82
        $region38: #{tpu_custom_call.1} parent=31 // pred_check_branch
          %230 = sbr.rel (%p228) target = $region40
        $region39: #{tpu_custom_call.1} parent=31 // pred_region
          %231 = dma.done %s224, 128
        $region40: #{tpu_custom_call.1} parent=31 // pred_fallthru
          _
        %s232 = sand.u32 %s23, 1
        %s233 = scalar_lea.sflag [#allocation10], %s232
        %s234 = sand.u32 %s95, 1
        %s235 = smul.addr %s234, 8
        %s236 = scalar_lea.vmem [#allocation11], %s235
        // Predicated region
        $region41: #{tpu_custom_call.1} parent=31 // pred_check
          %p237 = pneg %p108
        $region42: #{tpu_custom_call.1} parent=31 // pred_check_branch
          %239 = sbr.rel (%p237) target = $region44
        $region43: #{tpu_custom_call.1} parent=31 // pred_region
          %240 = dma.done %s233, 128
        $region44: #{tpu_custom_call.1} parent=31 // pred_fallthru
          _
        %s241 = sand.u32 %s43, 1
        %s242 = scalar_lea.sflag [#allocation7], %s241
        %s243 = sand.u32 %s43, 1
        %s244 = smul.addr %s243, 8
        %s245 = scalar_lea.vmem [#allocation6], %s244
        %p246 = pneg %p56
        %p247 = pneg %p53
        %s248 = sand.u32 %s23, 1
        %s249 = scalar_lea.sflag [#allocation10], %s248
        %s250 = sand.u32 %s69, 1
        %s251 = smul.addr %s250, 8
        %s252 = scalar_lea.vmem [#allocation9], %s251
        %p253 = pneg %p82
        %p254 = pneg %p79
        %s255 = sand.u32 %s23, 1
        %s256 = scalar_lea.sflag [#allocation10], %s255
        %s257 = sand.u32 %s95, 1
        %s258 = smul.addr %s257, 8
        %s259 = scalar_lea.vmem [#allocation11], %s258
        %p260 = pneg %p108
        %p261 = pneg %p105
        %p262 = pneg %p134
        %p263 = pneg %p131
        %s264 = sand.u32 %s121, 1
        %s265 = scalar_lea.sflag [#allocation8], %s264
        %s266 = sand.u32 %s121, 1
        %s267 = smul.addr %s266, 8
        %s268 = scalar_lea.vmem [#allocation12], %s267
        %p269 = scmp.eq.s32.totalorder %s28, 0
        // Predicated region
        $region45: #{tpu_custom_call.1} parent=31 // pred_check
          %p270 = pneg %p269
        $region46: #{tpu_custom_call.1} parent=31 // pred_check_branch
          %272 = sbr.rel (%p270) target = $region48
        $region47: #{tpu_custom_call.1} parent=31 // pred_region
          %vm273 = vcmask 7168
          %274 = vst.msk [vmem:[#allocation3] sm:$0xff] %vm273, -inf
          %275 = vst.msk [vmem:[#allocation4] sm:$0xff] %vm273, 0.0
          %vm276 = vcmask 261120
          %277 = vst.msk [vmem:[#allocation5] sm:$0xff] %vm276, 0.0
          %v278 = vld [vmem:[%s218] sm:$0xff]
          %v279 = vmul.f32 %v278, 0.17677669
          %280 = vst.msk [vmem:[#allocation2] sm:$0xff] %vm276, %v279
        $region48: #{tpu_custom_call.1} parent=31 // pred_fallthru
          _
        %v281 = vld [vmem:[#allocation2] sm:$0xff]
        %v282 = vld [vmem:[%s227] sm:$0xff]
        %vm283 = vcmask 261120
        %v285 = vsel %vm283, %v281, 0
        %v288 = vsel %vm283, %v282, 0
        %290 = vmatprep.subr.mxu0 0.0
        %291 = vmatpush1.xpose.msra.mxu0 0.0
        %292 = vmatprep.subr.mxu0 0.0
        %293 = vmatpush1.xpose.msra.mxu0 0.0
        %294 = vmatprep.subr.mxu0 0.0
        %295 = vmatpush1.xpose.msra.mxu0 0.0
        %296 = vmatprep.subr.mxu0 0.0
        %297 = vmatpush1.xpose.msra.mxu0 0.0
        %298 = vmatprep.subr.mxu0 0.0
        %299 = vmatpush1.xpose.msra.mxu0 0.0
        %300 = vmatprep.subr.mxu0 0.0
        %301 = vmatpush1.xpose.msra.mxu0 0.0
        %302 = vmatprep.subr.mxu0 0.0
        %303 = vmatpush1.xpose.msra.mxu0 0.0
        %304 = vmatprep.subr.mxu0 0.0
        %305 = vmatpush1.xpose.msra.mxu0 0.0
        %306 = vmatprep.subr.mxu0 0.0
        %307 = vmatpush1.xpose.msra.mxu0 0.0
        %308 = vmatprep.subr.mxu0 0.0
        %309 = vmatpush1.xpose.msra.mxu0 0.0
        %310 = vmatprep.subr.mxu0 0.0
        %311 = vmatpush1.xpose.msra.mxu0 0.0
        %312 = vmatprep.subr.mxu0 0.0
        %313 = vmatpush1.xpose.msra.mxu0 0.0
        %314 = vmatprep.subr.mxu0 0.0
        %315 = vmatpush1.xpose.msra.mxu0 0.0
        %316 = vmatprep.subr.mxu0 0.0
        %317 = vmatpush1.xpose.msra.mxu0 0.0
        %318 = vmatprep.subr.mxu0 0.0
        %319 = vmatpush1.xpose.msra.mxu0 0.0
        %320 = vmatprep.subr.mxu0 0.0
        %321 = vmatpush1.xpose.msra.mxu0 %v288
        %322 = vmatprep.subr.mxu0 0.0
        %323 = vmatpush2.xpose.msra.mxu0 0.0
        %324 = vmatprep.subr.mxu0 0.0
        %325 = vmatpush2.xpose.msra.mxu0 0.0
        %326 = vmatprep.subr.mxu0 0.0
        %327 = vmatpush2.xpose.msra.mxu0 0.0
        %328 = vmatprep.subr.mxu0 0.0
        %329 = vmatpush2.xpose.msra.mxu0 0.0
        %330 = vmatprep.subr.mxu0 0.0
        %331 = vmatpush2.xpose.msra.mxu0 0.0
        %332 = vmatprep.subr.mxu0 0.0
        %333 = vmatpush2.xpose.msra.mxu0 0.0
        %334 = vmatprep.subr.mxu0 0.0
        %335 = vmatpush2.xpose.msra.mxu0 0.0
        %336 = vmatprep.subr.mxu0 0.0
        %337 = vmatpush2.xpose.msra.mxu0 0.0
        %338 = vmatprep.subr.mxu0 0.0
        %339 = vmatpush2.xpose.msra.mxu0 0.0
        %340 = vmatprep.subr.mxu0 0.0
        %341 = vmatpush2.xpose.msra.mxu0 0.0
        %342 = vmatprep.subr.mxu0 0.0
        %343 = vmatpush2.xpose.msra.mxu0 0.0
        %344 = vmatprep.subr.mxu0 0.0
        %345 = vmatpush2.xpose.msra.mxu0 0.0
        %346 = vmatprep.subr.mxu0 0.0
        %347 = vmatpush2.xpose.msra.mxu0 0.0
        %348 = vmatprep.subr.mxu0 0.0
        %349 = vmatpush2.xpose.msra.mxu0 0.0
        %350 = vmatprep.subr.mxu0 0.0
        %351 = vmatpush2.xpose.msra.mxu0 0.0
        %352 = vmatprep.subr.mxu0 0.0
        %353 = vmatpush2.xpose.msra.mxu0 0.0
        %354 = vmatprep.mubr.f32.mxu0 0.0
        %355 = vmatmul.mubr.f32.gmra.mxu0 %v285
        %v356 = vpop.f32.mrf.mxu0
        %v357 = vadd.f32 0.0, %v356
        %v358 = vpop.f32.mrf.mxu0
        %359 = vdwg.mxu0
        %v360 = vld [vmem:[#allocation3] sm:$0xff]
        %vm361 = vcmask 64512
        %v362 = vsel %vm361, %v357, -inf
        %363 = vmax.xlane.f32.xlu0 %v362
        %v364 = vpop.xlane.xlu0 %363
        %v365 = vmax.f32 %v360, %v364
        %v366 = vsub.f32 %v360, %v365
        %v367 = vmul.f32 %v366, 1.442695
        %v368 = vpow.pop %v367
        %370 = vset.pattern.permute.xlu0 0
        %371 = vperm.xlu0 %370, %v365
        %v372 = vpop.permute.xlu0 %371
        %v374 = vsub.f32 %v357, %v372
        %v375 = vmul.f32 %v374, 1.442695
        %v376 = vpow.pop %v375
        %v377 = vld [vmem:[#allocation4] sm:$0xff]
        %v378 = vmul.f32 %v368, %v377
        %v379 = vsel %vm361, %v376, 0.0
        %380 = vadd.xlane.f32.xlu0 %v379
        %v381 = vpop.xlane.xlu0 %380
        %v382 = vadd.f32 %v378, %v381
        %vm383 = vcmask 7168
        %384 = vst.msk [vmem:[#allocation4] sm:$0xff] %vm383, %v382
        %v385 = vld [vmem:[#allocation5] sm:$0xff]
        %387 = vset.pattern.permute.xlu0 0
        %388 = vperm.xlu0 %387, %v368
        %v389 = vpop.permute.xlu0 %388
        %v391 = vmul.f32 %v389, %v385
        %v392 = vld [vmem:[%s236] sm:$0xff]
        %v394 = vsel %vm361, %v376, 0
        %396 = vmatprep.subr.mxu0 0.0
        %397 = vmatpush1.msra.mxu0 0.0
        %398 = vmatprep.subr.mxu0 0.0
        %399 = vmatpush1.msra.mxu0 0.0
        %400 = vmatprep.subr.mxu0 0.0
        %401 = vmatpush1.msra.mxu0 0.0
        %402 = vmatprep.subr.mxu0 0.0
        %403 = vmatpush1.msra.mxu0 0.0
        %404 = vmatprep.subr.mxu0 0.0
        %405 = vmatpush1.msra.mxu0 0.0
        %406 = vmatprep.subr.mxu0 0.0
        %407 = vmatpush1.msra.mxu0 0.0
        %408 = vmatprep.subr.mxu0 0.0
        %409 = vmatpush1.msra.mxu0 0.0
        %410 = vmatprep.subr.mxu0 0.0
        %411 = vmatpush1.msra.mxu0 0.0
        %412 = vmatprep.subr.mxu0 0.0
        %413 = vmatpush1.msra.mxu0 0.0
        %414 = vmatprep.subr.mxu0 0.0
        %415 = vmatpush1.msra.mxu0 0.0
        %416 = vmatprep.subr.mxu0 0.0
        %417 = vmatpush1.msra.mxu0 0.0
        %418 = vmatprep.subr.mxu0 0.0
        %419 = vmatpush1.msra.mxu0 0.0
        %420 = vmatprep.subr.mxu0 0.0
        %421 = vmatpush1.msra.mxu0 0.0
        %422 = vmatprep.subr.mxu0 0.0
        %423 = vmatpush1.msra.mxu0 0.0
        %424 = vmatprep.subr.mxu0 0.0
        %425 = vmatpush1.msra.mxu0 0.0
        %426 = vmatprep.subr.mxu0 0.0
        %427 = vmatpush1.msra.mxu0 %v392
        %428 = vmatprep.subr.mxu0 0.0
        %429 = vmatpush2.msra.mxu0 0.0
        %430 = vmatprep.subr.mxu0 0.0
        %431 = vmatpush2.msra.mxu0 0.0
        %432 = vmatprep.subr.mxu0 0.0
        %433 = vmatpush2.msra.mxu0 0.0
        %434 = vmatprep.subr.mxu0 0.0
        %435 = vmatpush2.msra.mxu0 0.0
        %436 = vmatprep.subr.mxu0 0.0
        %437 = vmatpush2.msra.mxu0 0.0
        %438 = vmatprep.subr.mxu0 0.0
        %439 = vmatpush2.msra.mxu0 0.0
        %440 = vmatprep.subr.mxu0 0.0
        %441 = vmatpush2.msra.mxu0 0.0
        %442 = vmatprep.subr.mxu0 0.0
        %443 = vmatpush2.msra.mxu0 0.0
        %444 = vmatprep.subr.mxu0 0.0
        %445 = vmatpush2.msra.mxu0 0.0
        %446 = vmatprep.subr.mxu0 0.0
        %447 = vmatpush2.msra.mxu0 0.0
        %448 = vmatprep.subr.mxu0 0.0
        %449 = vmatpush2.msra.mxu0 0.0
        %450 = vmatprep.subr.mxu0 0.0
        %451 = vmatpush2.msra.mxu0 0.0
        %452 = vmatprep.subr.mxu0 0.0
        %453 = vmatpush2.msra.mxu0 0.0
        %454 = vmatprep.subr.mxu0 0.0
        %455 = vmatpush2.msra.mxu0 0.0
        %456 = vmatprep.subr.mxu0 0.0
        %457 = vmatpush2.msra.mxu0 0.0
        %458 = vmatprep.subr.mxu0 0.0
        %459 = vmatpush2.msra.mxu0 0.0
        %460 = vmatprep.mubr.f32.mxu0 0.0
        %461 = vmatmul.mubr.f32.gmra.mxu0 %v394
        %v462 = vpop.f32.mrf.mxu0
        %v463 = vadd.f32 0.0, %v462
        %v464 = vpop.f32.mrf.mxu0
        %465 = vdwg.mxu0
        %v466 = vadd.f32 %v391, %v463
        %467 = vst.msk [vmem:[#allocation5] sm:$0xff] %vm283, %v466
        %468 = vst.msk [vmem:[#allocation3] sm:$0xff] %vm383, %v365
        %p469 = scmp.eq.s32.totalorder %s28, 1
        // Predicated region
        $region49: #{tpu_custom_call.1} parent=31 // pred_check
          %p470 = pneg %p469
        $region50: #{tpu_custom_call.1} parent=31 // pred_check_branch
          %472 = sbr.rel (%p470) target = $region52
        $region51: #{tpu_custom_call.1} parent=31 // pred_region
          %v473 = vld [vmem:[#allocation4] sm:$0xff]
          %v474 = vrcp.pop %v473
          %v475 = vld [vmem:[#allocation5] sm:$0xff]
          %477 = vset.pattern.permute.xlu0 0
          %478 = vperm.xlu0 %477, %v474
          %v479 = vpop.permute.xlu0 %478
          %v481 = vmul.f32 %v475, %v479
          %482 = vst.msk [vmem:[%s268] sm:$0xff] %vm283, %v481
        $region52: #{tpu_custom_call.1} parent=31 // pred_fallthru
          _
        %s483 = sand.u32 %s121, 1
        %s484 = scalar_lea.sflag [#allocation8], %s483
        %s485 = sand.u32 %s121, 1
        %s486 = smul.addr %s485, 8
        %s487 = scalar_lea.vmem [#allocation12], %s486
        // Predicated region
        $region53: #{tpu_custom_call.1} parent=31 // pred_check
          %p488 = pneg %p131
        $region54: #{tpu_custom_call.1} parent=31 // pred_check_branch
          %490 = sbr.rel (%p488) target = $region56
        $region55: #{tpu_custom_call.1} parent=31 // pred_region
          %s492 = ssub.s32 128, 128
          %493 = vsyncadd %s484, %s492
          %s494 = smul.addr %s27, 128
          %s495 = scalar_lea.hbm %s3, %s494
          %s497 = sshll.u32 %s487, 4
          %s498 = int_to_ptr.vmem [resolvable:$true] %s497
          %500 = dma.vmem_to_hbm [thread:$0]  %s498, 128, %s495, %s484
        $region56: #{tpu_custom_call.1} parent=31 // pred_fallthru
          _
      $region32: #{tpu_custom_call.1} parent=5 // pred_fallthru
        _
      %p501 = scmp.le.s32.totalorder 2, %s18
      // Predicated region
      $region57: #{tpu_custom_call.1} parent=5 // pred_check
        %p502 = pneg %p501
      $region58: #{tpu_custom_call.1} parent=5 // pred_check_branch
        %504 = sbr.rel (%p502) target = $region60
      $region59: #{tpu_custom_call.1} parent=5 // pred_region
        %s505 = ssub.s32 %s18, 2
        // Predicated region
        $region61: #{tpu_custom_call.1} parent=59 // pred_check
          %p506 = pneg %p137
        $region62: #{tpu_custom_call.1} parent=59 // pred_check_branch
          %508 = sbr.rel (%p506) target = $region64
        $region63: #{tpu_custom_call.1} parent=59 // pred_region
          %s509 = sand.u32 %s122, 1
          %s510 = scalar_lea.sflag [#allocation8], %s509
          %s511 = sand.u32 %s122, 1
          %s512 = smul.addr %s511, 8
          %s513 = scalar_lea.vmem [#allocation12], %s512
          %514 = dma.done %s510, 128
        $region64: #{tpu_custom_call.1} parent=59 // pred_fallthru
          _
      $region60: #{tpu_custom_call.1} parent=5 // pred_fallthru
        _
    $region6: #{tpu_custom_call.1} parent=1 // loop_footer
      %s22 = sadd.s32 1, %s18
    $region7: #{tpu_custom_call.1} parent=1 // loop_footer_branch
      %17 = sbr.rel target = $region3
    $region8: #{tpu_custom_call.1} parent=1 // loop_exit
      _
    %515 = vsyncpa [#allocation7], 1
    %s516 = scalar_lea.sflag [#allocation7], 1
    %517 = vsyncpa %s516, 1
    %518 = vsyncpa [#allocation10], 1
    %s519 = scalar_lea.sflag [#allocation10], 1
    %520 = vsyncpa %s519, 1
    %521 = vsyncpa [#allocation8], 1
    %s522 = scalar_lea.sflag [#allocation8], 1
    %523 = vsyncpa %s522, 1

</llo_original>
